<compile_context>
chip_gen: v5e
topology: v5e:2x2
jax: 0.10.0
libtpu: 0.0.40
codegen_flags: <defaults>
</compile_context>

<pallas_src>
from functools import partial

import jax
import jax.numpy as jnp
from jax.experimental import pallas as pl
from jax.experimental.pallas import tpu as pltpu

A_HEAD = 128            # fused mean|log_std head width (one lane-dense vreg)
BLOCK_B = 1024          # max batch tile (review: 1024-2048); VMEM use ~6 MiB
DIM_SEMANTICS = ("parallel",)
# DIM_SEMANTICS = (pltpu.CORE_PARALLEL,)   # v7x: shard batch grid across 2 TCs


def _cdiv(a, b):
    return -(-a // b)


def _round_up(a, m):
    return _cdiv(a, m) * m


def regular_actor_kernel(state_ref, w1_ref, b1_ref, w2_ref, b2_ref,
                         wh_ref, bh_ref, noise_ref, maxa_ref, out_ref,
                         *, action_dim):
    # l1 + relu : bf16 state/weights, f32 accumulation, f32 activations
    h1 = jnp.dot(state_ref[...], w1_ref[...],
                 preferred_element_type=jnp.float32) + b1_ref[...]
    h1 = jnp.maximum(h1, 0.0)

    # l2 + relu
    h2 = jnp.dot(h1.astype(jnp.bfloat16), w2_ref[...],
                 preferred_element_type=jnp.float32) + b2_ref[...]
    h2 = jnp.maximum(h2, 0.0)

    # fused 128-lane head: mean in lanes [0, A), log_std in lanes [A, 2A)
    heads = jnp.dot(h2.astype(jnp.bfloat16), wh_ref[...],
                    preferred_element_type=jnp.float32) + bh_ref[...]
    mean_a = heads[:, :action_dim]
    log_std_a = heads[:, action_dim:2 * action_dim]

    # TODO(synk): torch RegularActor.forward does not clamp log_std; matched.
    std_a = jnp.exp(log_std_a)
    z = mean_a + std_a * noise_ref[...]
    out_ref[...] = (maxa_ref[...] * jnp.tanh(z)).astype(out_ref.dtype)


def pack_params(params, action_dim, a_head=A_HEAD):
    """Zero-pad hidden dims to lane multiples, fuse mean/log_std into a single
    128-lane head, cast weights to bf16 (biases stay f32)."""
    assert 2 * action_dim <= a_head, "action_dim too large for fused 128-lane head"

    w1 = params["w1"].astype(jnp.float32)   # (S, 400)
    b1 = params["b1"].astype(jnp.float32)   # (1, 400)
    w2 = params["w2"].astype(jnp.float32)   # (400, 300)
    b2 = params["b2"].astype(jnp.float32)   # (1, 300)
    wm = params["wm"].astype(jnp.float32)   # (300, A)
    bm = params["bm"].astype(jnp.float32)   # (1, A)
    ws = params["ws"].astype(jnp.float32)   # (300, A)
    bs = params["bs"].astype(jnp.float32)   # (1, A)

    h1_pad = _round_up(w1.shape[1], 128)    # 400 -> 512
    h2_pad = _round_up(w2.shape[1], 128)    # 300 -> 384

    w1p = jnp.pad(w1, ((0, 0), (0, h1_pad - w1.shape[1])))
    b1p = jnp.pad(b1, ((0, 0), (0, h1_pad - b1.shape[1])))
    w2p = jnp.pad(w2, ((0, h1_pad - w2.shape[0]), (0, h2_pad - w2.shape[1])))
    b2p = jnp.pad(b2, ((0, 0), (0, h2_pad - b2.shape[1])))

    wm_p = jnp.pad(wm, ((0, h2_pad - wm.shape[0]), (0, 0)))
    ws_p = jnp.pad(ws, ((0, h2_pad - ws.shape[0]), (0, 0)))
    tail = a_head - 2 * action_dim
    wh = jnp.concatenate(
        [wm_p, ws_p, jnp.zeros((h2_pad, tail), jnp.float32)], axis=1)
    bh = jnp.concatenate([bm, bs, jnp.zeros((1, tail), jnp.float32)], axis=1)

    return dict(
        w1=w1p.astype(jnp.bfloat16), b1=b1p,
        w2=w2p.astype(jnp.bfloat16), b2=b2p,
        wh=wh.astype(jnp.bfloat16), bh=bh,
    )


def regular_actor_forward(state, packed, noise, max_action, *, block_b=BLOCK_B):
    B, S = state.shape
    A = max_action.shape[-1]

    # Adaptive batch tile: as few grid steps as possible, tile rounded to 16
    # rows (bf16 sublane-pack-safe), minimal batch padding.
    n_steps = max(1, _cdiv(B, block_b))
    tb = _round_up(_cdiv(B, n_steps), 16)
    b_pad = n_steps * tb

    state_p = jnp.pad(state.astype(jnp.float32),
                      ((0, b_pad - B), (0, 0))).astype(jnp.bfloat16)
    noise_p = jnp.pad(noise.astype(jnp.float32), ((0, b_pad - B), (0, 0)))
    maxa_p = max_action.reshape(1, A).astype(jnp.float32)

    const = lambda i: (0, 0)
    batched = lambda i: (i, 0)

    out = pl.pallas_call(
        partial(regular_actor_kernel, action_dim=A),
        out_shape=jax.ShapeDtypeStruct((b_pad, A), jnp.float32),
        grid_spec=pltpu.PrefetchScalarGridSpec(
            num_scalar_prefetch=0,
            grid=(n_steps,),
            in_specs=[
                pl.BlockSpec((tb, S), batched),           # state (bf16)
                pl.BlockSpec(packed["w1"].shape, const),  # w1 (VMEM-resident)
                pl.BlockSpec(packed["b1"].shape, const),  # b1
                pl.BlockSpec(packed["w2"].shape, const),  # w2 (VMEM-resident)
                pl.BlockSpec(packed["b2"].shape, const),  # b2
                pl.BlockSpec(packed["wh"].shape, const),  # fused head weight
                pl.BlockSpec(packed["bh"].shape, const),  # fused head bias
                pl.BlockSpec((tb, A), batched),           # noise (unpadded)
                pl.BlockSpec((1, A), const),              # max_action
            ],
            out_specs=pl.BlockSpec((tb, A), batched),     # unpadded output
        ),
        compiler_params=pltpu.CompilerParams(
            dimension_semantics=DIM_SEMANTICS,
            vmem_limit_bytes=32 * 1024 * 1024,
        ),
    )(state_p, packed["w1"], packed["b1"], packed["w2"], packed["b2"],
      packed["wh"], packed["bh"], noise_p, maxa_p)

    return out[:B]


def init_params(key, state_dim, action_dim):
    """Deterministic synthetic parameters (uniform fan-in init like torch)."""
    ks = jax.random.split(key, 8)

    def lin(kw, kb, fan_in, fan_out):
        bound = 1.0 / jnp.sqrt(jnp.float32(fan_in))
        w = jax.random.uniform(kw, (fan_in, fan_out), jnp.float32, -bound, bound)
        b = jax.random.uniform(kb, (1, fan_out), jnp.float32, -bound, bound)
        return w, b

    w1, b1 = lin(ks[0], ks[1], state_dim, 400)
    w2, b2 = lin(ks[2], ks[3], 400, 300)
    wm, bm = lin(ks[4], ks[5], 300, action_dim)
    ws, bs = lin(ks[6], ks[7], 300, action_dim)
    return dict(w1=w1, b1=b1, w2=w2, b2=b2, wm=wm, bm=bm, ws=ws, bs=bs)


if __name__ == "__main__":
    key = jax.random.PRNGKey(0)
    k_params, k_state, k_noise = jax.random.split(key, 3)

    batch, state_dim, action_dim = 8, 16, 8

    params = init_params(k_params, state_dim, action_dim)
    packed = pack_params(params, action_dim)

    state = jax.random.normal(k_state, (batch, state_dim), jnp.float32)
    noise = jax.random.normal(k_noise, (batch, action_dim), jnp.float32)
    max_action = jnp.ones((action_dim,), jnp.float32)

    out = regular_actor_forward(state, packed, noise, max_action)
    jax.block_until_ready(out)
    assert out.shape == (batch, action_dim)

    # Reference 1: bf16-consistent (same packed/padded weights, same cast points)
    sb = state.astype(jnp.bfloat16)
    h1 = jnp.maximum(jnp.dot(sb, packed["w1"],
                             preferred_element_type=jnp.float32) + packed["b1"], 0.0)
    h2 = jnp.maximum(jnp.dot(h1.astype(jnp.bfloat16), packed["w2"],
                             preferred_element_type=jnp.float32) + packed["b2"], 0.0)
    heads = jnp.dot(h2.astype(jnp.bfloat16), packed["wh"],
                    preferred_element_type=jnp.float32) + packed["bh"]
    mean = heads[:, :action_dim]
    std = jnp.exp(heads[:, action_dim:2 * action_dim])
    ref_bf16 = max_action * jnp.tanh(mean + std * noise)
    assert jnp.allclose(out, ref_bf16, atol=2e-3, rtol=2e-3), "mismatch vs bf16 reference"

    # Reference 2: full f32 semantics of the original torch module (loose tol;
    # the only difference is bf16 weight quantization inside the matmuls)
    h1f = jnp.maximum(state @ params["w1"] + params["b1"], 0.0)
    h2f = jnp.maximum(h1f @ params["w2"] + params["b2"], 0.0)
    meanf = h2f @ params["wm"] + params["bm"]
    stdf = jnp.exp(h2f @ params["ws"] + params["bs"])
    ref_f32 = max_action * jnp.tanh(meanf + stdf * noise)
    assert jnp.allclose(out, ref_f32, atol=5e-2, rtol=5e-2), "mismatch vs f32 reference"

    print("KERNEL_OK")
</pallas_src>

<mosaic_0001>
module attributes {stable_mosaic.version = 11 : i64} {
  func.func @regular_actor_kernel(%arg0: i32, %arg1: memref<16x16xbf16, #tpu.memory_space<vmem>>, %arg2: memref<16x512xbf16, #tpu.memory_space<vmem>>, %arg3: memref<1x512xf32, #tpu.memory_space<vmem>>, %arg4: memref<512x384xbf16, #tpu.memory_space<vmem>>, %arg5: memref<1x384xf32, #tpu.memory_space<vmem>>, %arg6: memref<384x128xbf16, #tpu.memory_space<vmem>>, %arg7: memref<1x128xf32, #tpu.memory_space<vmem>>, %arg8: memref<16x8xf32, #tpu.memory_space<vmem>>, %arg9: memref<1x8xf32, #tpu.memory_space<vmem>>, %arg10: memref<16x8xf32, #tpu.memory_space<vmem>>) attributes {dimension_semantics = [#tpu.dimension_semantics<parallel>], iteration_bounds = array<i64: 1>, scalar_prefetch = 0 : i64, scratch_operands = 0 : i64, tpu.core_type = #tpu.core_type<tc>, window_params = [{transform_indices = @transform_0, window_bounds = array<i64: 16, 16>}, {pipeline_mode = #tpu.pipeline_mode<synchronous>, transform_indices = @transform_1, window_bounds = array<i64: 16, 512>}, {pipeline_mode = #tpu.pipeline_mode<synchronous>, transform_indices = @transform_2, window_bounds = array<i64: 1, 512>}, {pipeline_mode = #tpu.pipeline_mode<synchronous>, transform_indices = @transform_3, window_bounds = array<i64: 512, 384>}, {pipeline_mode = #tpu.pipeline_mode<synchronous>, transform_indices = @transform_4, window_bounds = array<i64: 1, 384>}, {pipeline_mode = #tpu.pipeline_mode<synchronous>, transform_indices = @transform_5, window_bounds = array<i64: 384, 128>}, {pipeline_mode = #tpu.pipeline_mode<synchronous>, transform_indices = @transform_6, window_bounds = array<i64: 1, 128>}, {transform_indices = @transform_7, window_bounds = array<i64: 16, 8>}, {pipeline_mode = #tpu.pipeline_mode<synchronous>, transform_indices = @transform_8, window_bounds = array<i64: 1, 8>}, {transform_indices = @transform_9, window_bounds = array<i64: 16, 8>}]} {
    %c0 = arith.constant 0 : index
    %c0_0 = arith.constant 0 : index
    %0 = vector.load %arg1[%c0, %c0_0] : memref<16x16xbf16, #tpu.memory_space<vmem>>, vector<16x16xbf16>
    %c0_1 = arith.constant 0 : index
    %c0_2 = arith.constant 0 : index
    %1 = vector.load %arg2[%c0_1, %c0_2] : memref<16x512xbf16, #tpu.memory_space<vmem>>, vector<16x512xbf16>
    %cst = arith.constant dense<0.000000e+00> : vector<16x512xf32>
    %2 = tpu.matmul %0, %1, %cst {dimension_numbers = #tpu.dot_dimension_numbers<[1], [0], [0], [1], [0, 0, 1, 1], [], []>} : vector<16x16xbf16>, vector<16x512xbf16>, vector<16x512xf32> -> vector<16x512xf32>
    %c0_3 = arith.constant 0 : index
    %c0_4 = arith.constant 0 : index
    %3 = vector.load %arg3[%c0_3, %c0_4] : memref<1x512xf32, #tpu.memory_space<vmem>>, vector<1x512xf32>
    %4 = vector.broadcast %3 : vector<1x512xf32> to vector<16x512xf32>
    %5 = arith.addf %2, %4 : vector<16x512xf32>
    %cst_5 = arith.constant 0.000000e+00 : f32
    %6 = vector.broadcast %cst_5 : f32 to vector<16x512xf32>
    %7 = arith.maximumf %5, %6 : vector<16x512xf32>
    %8 = arith.truncf %7 : vector<16x512xf32> to vector<16x512xbf16>
    %c0_6 = arith.constant 0 : index
    %c0_7 = arith.constant 0 : index
    %9 = vector.load %arg4[%c0_6, %c0_7] : memref<512x384xbf16, #tpu.memory_space<vmem>>, vector<512x384xbf16>
    %cst_8 = arith.constant dense<0.000000e+00> : vector<16x384xf32>
    %10 = tpu.matmul %8, %9, %cst_8 {dimension_numbers = #tpu.dot_dimension_numbers<[1], [0], [0], [1], [0, 0, 1, 1], [], []>} : vector<16x512xbf16>, vector<512x384xbf16>, vector<16x384xf32> -> vector<16x384xf32>
    %c0_9 = arith.constant 0 : index
    %c0_10 = arith.constant 0 : index
    %11 = vector.load %arg5[%c0_9, %c0_10] : memref<1x384xf32, #tpu.memory_space<vmem>>, vector<1x384xf32>
    %12 = vector.broadcast %11 : vector<1x384xf32> to vector<16x384xf32>
    %13 = arith.addf %10, %12 : vector<16x384xf32>
    %cst_11 = arith.constant 0.000000e+00 : f32
    %14 = vector.broadcast %cst_11 : f32 to vector<16x384xf32>
    %15 = arith.maximumf %13, %14 : vector<16x384xf32>
    %16 = arith.truncf %15 : vector<16x384xf32> to vector<16x384xbf16>
    %c0_12 = arith.constant 0 : index
    %c0_13 = arith.constant 0 : index
    %17 = vector.load %arg6[%c0_12, %c0_13] : memref<384x128xbf16, #tpu.memory_space<vmem>>, vector<384x128xbf16>
    %cst_14 = arith.constant dense<0.000000e+00> : vector<16x128xf32>
    %18 = tpu.matmul %16, %17, %cst_14 {dimension_numbers = #tpu.dot_dimension_numbers<[1], [0], [0], [1], [0, 0, 1, 1], [], []>} : vector<16x384xbf16>, vector<384x128xbf16>, vector<16x128xf32> -> vector<16x128xf32>
    %c0_15 = arith.constant 0 : index
    %c0_16 = arith.constant 0 : index
    %19 = vector.load %arg7[%c0_15, %c0_16] : memref<1x128xf32, #tpu.memory_space<vmem>>, vector<1x128xf32>
    %20 = vector.broadcast %19 : vector<1x128xf32> to vector<16x128xf32>
    %21 = arith.addf %18, %20 : vector<16x128xf32>
    %22 = vector.extract_strided_slice %21 {offsets = [0, 0], sizes = [16, 8], strides = [1, 1]} : vector<16x128xf32> to vector<16x8xf32>
    %23 = vector.extract_strided_slice %21 {offsets = [0, 8], sizes = [16, 8], strides = [1, 1]} : vector<16x128xf32> to vector<16x8xf32>
    %24 = math.exp %23 : vector<16x8xf32>
    %c0_17 = arith.constant 0 : index
    %c0_18 = arith.constant 0 : index
    %25 = vector.load %arg8[%c0_17, %c0_18] : memref<16x8xf32, #tpu.memory_space<vmem>>, vector<16x8xf32>
    %26 = arith.mulf %24, %25 : vector<16x8xf32>
    %27 = arith.addf %22, %26 : vector<16x8xf32>
    %c0_19 = arith.constant 0 : index
    %c0_20 = arith.constant 0 : index
    %28 = vector.load %arg9[%c0_19, %c0_20] : memref<1x8xf32, #tpu.memory_space<vmem>>, vector<1x8xf32>
    %29 = math.tanh %27 : vector<16x8xf32>
    %30 = vector.broadcast %28 : vector<1x8xf32> to vector<16x8xf32>
    %31 = arith.mulf %30, %29 : vector<16x8xf32>
    %c0_21 = arith.constant 0 : index
    %c0_22 = arith.constant 0 : index
    %32 = vector.load %arg10[%c0_21, %c0_22] : memref<16x8xf32, #tpu.memory_space<vmem>>, vector<16x8xf32>
    tpu.vector_store %arg10[%c0_21, %c0_22], %31 {strides = array<i32>} : memref<16x8xf32, #tpu.memory_space<vmem>>, vector<16x8xf32>,
    return
  }
  func.func @transform_0(%arg0: i32) -> (i32, i32) {
    %c0_i32 = arith.constant 0 : i32
    %c0_i32_0 = arith.constant 0 : i32
    return %arg0, %c0_i32 : i32, i32
  }
  func.func @transform_1(%arg0: i32) -> (i32, i32) {
    %c0_i32 = arith.constant 0 : i32
    %c0_i32_0 = arith.constant 0 : i32
    %c0_i32_1 = arith.constant 0 : i32
    return %c0_i32, %c0_i32_0 : i32, i32
  }
  func.func @transform_2(%arg0: i32) -> (i32, i32) {
    %c0_i32 = arith.constant 0 : i32
    %c0_i32_0 = arith.constant 0 : i32
    %c0_i32_1 = arith.constant 0 : i32
    return %c0_i32, %c0_i32_0 : i32, i32
  }
  func.func @transform_3(%arg0: i32) -> (i32, i32) {
    %c0_i32 = arith.constant 0 : i32
    %c0_i32_0 = arith.constant 0 : i32
    %c0_i32_1 = arith.constant 0 : i32
    return %c0_i32, %c0_i32_0 : i32, i32
  }
  func.func @transform_4(%arg0: i32) -> (i32, i32) {
    %c0_i32 = arith.constant 0 : i32
    %c0_i32_0 = arith.constant 0 : i32
    %c0_i32_1 = arith.constant 0 : i32
    return %c0_i32, %c0_i32_0 : i32, i32
  }
  func.func @transform_5(%arg0: i32) -> (i32, i32) {
    %c0_i32 = arith.constant 0 : i32
    %c0_i32_0 = arith.constant 0 : i32
    %c0_i32_1 = arith.constant 0 : i32
    return %c0_i32, %c0_i32_0 : i32, i32
  }
  func.func @transform_6(%arg0: i32) -> (i32, i32) {
    %c0_i32 = arith.constant 0 : i32
    %c0_i32_0 = arith.constant 0 : i32
    %c0_i32_1 = arith.constant 0 : i32
    return %c0_i32, %c0_i32_0 : i32, i32
  }
  func.func @transform_7(%arg0: i32) -> (i32, i32) {
    %c0_i32 = arith.constant 0 : i32
    %c0_i32_0 = arith.constant 0 : i32
    return %arg0, %c0_i32 : i32, i32
  }
  func.func @transform_8(%arg0: i32) -> (i32, i32) {
    %c0_i32 = arith.constant 0 : i32
    %c0_i32_0 = arith.constant 0 : i32
    %c0_i32_1 = arith.constant 0 : i32
    return %c0_i32, %c0_i32_0 : i32, i32
  }
  func.func @transform_9(%arg0: i32) -> (i32, i32) {
    %c0_i32 = arith.constant 0 : i32
    %c0_i32_0 = arith.constant 0 : i32
    return %arg0, %c0_i32 : i32, i32
  }
}

</mosaic_0001>

<llo_original>
// kernel: tpu_custom_call.1
$region0: #{tpu_custom_call.1}
  #allocation0 [shape = 'u32[]', space=smem, size = 0x4, offset = 0x4, fixed_abs, tag = 'smem constant byte address 0x4 - core index']
  #allocation1 [shape = 'u32[72,128]{1,0:T(1,128)}', space=vmem, size = 0x9000, scoped, tag = 'internal scratch']
  %s0 = inlined_call_operand.vmem [shape: bf16[16,16], index: 0, kind: input, shape index: {}]
  %s1 = inlined_call_operand.hbm [shape: bf16[16,512], index: 1, kind: input, shape index: {}]
  %s2 = inlined_call_operand.vmem [shape: f32[1,512], index: 2, kind: input, shape index: {}]
  %s3 = inlined_call_operand.hbm [shape: bf16[512,384], index: 3, kind: input, shape index: {}]
  %s4 = inlined_call_operand.vmem [shape: f32[1,384], index: 4, kind: input, shape index: {}]
  %s5 = inlined_call_operand.hbm [shape: bf16[384,128], index: 5, kind: input, shape index: {}]
  %s6 = inlined_call_operand.vmem [shape: f32[1,128], index: 6, kind: input, shape index: {}]
  %s7 = inlined_call_operand.vmem [shape: f32[16,8], index: 7, kind: input, shape index: {}]
  %s8 = inlined_call_operand.vmem [shape: f32[1,8], index: 8, kind: input, shape index: {}]
  %s9 = inlined_call_operand.vmem [shape: f32[16,8], index: 9, kind: output, shape index: {}]
  %s10 = sld [smem:[#allocation0]]
  $region58: #{tpu_custom_call.1} parent=0
    _
  %s12 = ssub.s32 1, %s10
  %s13 = scalar_select 0, %s12, %s10
  $region1: #{tpu_custom_call.1} parent=0
    #allocation2 [shape = 'u8[16384]{0}', space=vmem, size = 0x4000, scoped, tag = 'input window, operand 1, single buffered']
    #allocation3 [shape = 's32[1]{0}', space=sflag, size = 0x4, scoped, tag = 'scoped memory for tpu_custom_call.1']
    #allocation4 [shape = 'u8[393216]{0}', space=vmem, size = 0x60000, scoped, tag = 'input window, operand 3, single buffered']
    #allocation5 [shape = 's32[1]{0}', space=sflag, size = 0x4, scoped, tag = 'scoped memory for tpu_custom_call.1']
    #allocation6 [shape = 'u8[98304]{0}', space=vmem, size = 0x18000, scoped, tag = 'input window, operand 5, single buffered']
    %14 = vsyncpa [#allocation3], 0
    %15 = vsyncpa [#allocation5], 0
    // Predicated region
    $region2: #{tpu_custom_call.1} parent=1 // pred_check
      _
    $region3: #{tpu_custom_call.1} parent=1 // pred_check_branch
      %17 = sbr.rel (0) target = $region5
    $region4: #{tpu_custom_call.1} parent=1 // pred_region
      _
    $region5: #{tpu_custom_call.1} parent=1 // pred_fallthru
      _
    // Predicated region
    $region6: #{tpu_custom_call.1} parent=1 // pred_check
      _
    $region7: #{tpu_custom_call.1} parent=1 // pred_check_branch
      %19 = sbr.rel (0) target = $region9
    $region8: #{tpu_custom_call.1} parent=1 // pred_region
      %21 = vsyncadd [#allocation3], 0
      %s22 = sshll.u32 %s1, 4
      %s23 = int_to_ptr.hbm [resolvable:$true] %s22
      %s24 = sshll.u32 [#allocation2], 4
      %s25 = int_to_ptr.vmem [resolvable:$true] %s24
      %30 = dma.hbm_to_vmem [thread:$0]  %s23, 512, %s25, [#allocation3], 256, 256, 16
    $region9: #{tpu_custom_call.1} parent=1 // pred_fallthru
      _
    // Predicated region
    $region10: #{tpu_custom_call.1} parent=1 // pred_check
      _
    $region11: #{tpu_custom_call.1} parent=1 // pred_check_branch
      %32 = sbr.rel (0) target = $region13
    $region12: #{tpu_custom_call.1} parent=1 // pred_region
      _
    $region13: #{tpu_custom_call.1} parent=1 // pred_fallthru
      _
    // Predicated region
    $region14: #{tpu_custom_call.1} parent=1 // pred_check
      _
    $region15: #{tpu_custom_call.1} parent=1 // pred_check_branch
      %34 = sbr.rel (0) target = $region17
    $region16: #{tpu_custom_call.1} parent=1 // pred_region
      %36 = vsyncadd [#allocation5], 0
      %s37 = sshll.u32 %s3, 4
      %s38 = int_to_ptr.hbm [resolvable:$true] %s37
      %s39 = sshll.u32 [#allocation4], 4
      %s40 = int_to_ptr.vmem [resolvable:$true] %s39
      %45 = dma.hbm_to_vmem [thread:$0]  %s38, 12288, %s40, [#allocation5], 192, 192, 12
    $region17: #{tpu_custom_call.1} parent=1 // pred_fallthru
      _
    // Predicated region
    $region18: #{tpu_custom_call.1} parent=1 // pred_check
      _
    $region19: #{tpu_custom_call.1} parent=1 // pred_check_branch
      %47 = sbr.rel (0) target = $region21
    $region20: #{tpu_custom_call.1} parent=1 // pred_region
      _
    $region21: #{tpu_custom_call.1} parent=1 // pred_fallthru
      _
    // Predicated region
    $region22: #{tpu_custom_call.1} parent=1 // pred_check
      _
    $region23: #{tpu_custom_call.1} parent=1 // pred_check_branch
      %49 = sbr.rel (0) target = $region25
    $region24: #{tpu_custom_call.1} parent=1 // pred_region
      %51 = vsyncadd [#allocation5], 0
      %s52 = sshll.u32 %s5, 4
      %s53 = int_to_ptr.hbm [resolvable:$true] %s52
      %s54 = sshll.u32 [#allocation6], 4
      %s55 = int_to_ptr.vmem [resolvable:$true] %s54
      %60 = dma.hbm_to_vmem [thread:$0]  %s53, 3072, %s55, [#allocation5], 64, 64, 4
    $region25: #{tpu_custom_call.1} parent=1 // pred_fallthru
      _
    // Predicated region
    $region26: #{tpu_custom_call.1} parent=1 // pred_check
      _
    $region27: #{tpu_custom_call.1} parent=1 // pred_check_branch
      %62 = sbr.rel (0) target = $region29
    $region28: #{tpu_custom_call.1} parent=1 // pred_region
      _
    $region29: #{tpu_custom_call.1} parent=1 // pred_fallthru
      _
    // Predicated region
    $region30: #{tpu_custom_call.1} parent=1 // pred_check
      _
    $region31: #{tpu_custom_call.1} parent=1 // pred_check_branch
      %64 = sbr.rel (0) target = $region33
    $region32: #{tpu_custom_call.1} parent=1 // pred_region
      _
    $region33: #{tpu_custom_call.1} parent=1 // pred_fallthru
      _
    // Predicated region
    $region34: #{tpu_custom_call.1} parent=1 // pred_check
      _
    $region35: #{tpu_custom_call.1} parent=1 // pred_check_branch
      %66 = sbr.rel (0) target = $region37
    $region36: #{tpu_custom_call.1} parent=1 // pred_region
      _
    $region37: #{tpu_custom_call.1} parent=1 // pred_fallthru
      _
    // Predicated region
    $region38: #{tpu_custom_call.1} parent=1 // pred_check
      _
    $region39: #{tpu_custom_call.1} parent=1 // pred_check_branch
      %68 = sbr.rel (0) target = $region41
    $region40: #{tpu_custom_call.1} parent=1 // pred_region
      %70 = dma.done [#allocation3], 512
    $region41: #{tpu_custom_call.1} parent=1 // pred_fallthru
      _
    // Predicated region
    $region42: #{tpu_custom_call.1} parent=1 // pred_check
      _
    $region43: #{tpu_custom_call.1} parent=1 // pred_check_branch
      %72 = sbr.rel (0) target = $region45
    $region44: #{tpu_custom_call.1} parent=1 // pred_region
      %74 = dma.done [#allocation5], 12288
    $region45: #{tpu_custom_call.1} parent=1 // pred_fallthru
      _
    // Predicated region
    $region46: #{tpu_custom_call.1} parent=1 // pred_check
      _
    $region47: #{tpu_custom_call.1} parent=1 // pred_check_branch
      %76 = sbr.rel (0) target = $region49
    $region48: #{tpu_custom_call.1} parent=1 // pred_region
      %78 = dma.done [#allocation5], 3072
    $region49: #{tpu_custom_call.1} parent=1 // pred_fallthru
      _
    %v80 = vld [vmem:[%s0] sm:$0xf]
    %v81 = vld [vmem:[%s0 + $0x4] sm:$0xf]
    %v82 = vld [vmem:[#allocation2] sm:$0xff]
    %v83 = vld [vmem:[#allocation2 + $0x8] sm:$0xff]
    %v84 = vld [vmem:[#allocation2 + $0x10] sm:$0xff]
    %v85 = vld [vmem:[#allocation2 + $0x18] sm:$0xff]
    %v86 = vld [vmem:[%s2] sm:$0xf]
    %v88 = vperm.slane %v86, 0
    %v89 = vperm.slane %v86, 1
    %v90 = vperm.slane %v86, 2
    %v91 = vperm.slane %v86, 3
    %v98 = vunpack.c.l.b16 %v80
    %v99 = vunpack.c.l.b16 %v81
    %v100 = vpack.c.b16 %v99, %v98
    %v105 = vunpack.c.l.b16 %v82
    %v106 = vunpack.c.h.b16 %v82
    %v107 = vunpack.c.l.b16 %v83
    %v108 = vunpack.c.h.b16 %v83
    %v109 = vunpack.c.l.b16 %v84
    %v110 = vunpack.c.h.b16 %v84
    %v111 = vunpack.c.l.b16 %v85
    %v112 = vunpack.c.h.b16 %v85
    %v113 = vpack.c.b16 %v109, %v105
    %v114 = vpack.c.b16 %v110, %v106
    %v115 = vpack.c.b16 %v111, %v107
    %v116 = vpack.c.b16 %v112, %v108
    %vm121 = vcmask 130048
    %v123 = vsel %vm121, %v100, 0
    %125 = vmatpush.bf16.msra.mxu0 0
    %126 = vmatpush.bf16.msra.mxu0 0
    %127 = vmatpush.bf16.msra.mxu0 0
    %128 = vmatpush.bf16.msra.mxu0 0
    %129 = vmatpush.bf16.msra.mxu0 0
    %130 = vmatpush.bf16.msra.mxu0 0
    %131 = vmatpush.bf16.msra.mxu0 0
    %132 = vmatpush.bf16.msra.mxu0 %v113
    %133 = vmatmul.bf16.gmra.mxu0 %v123
    %v134 = vpop.f32.mrf.mxu0
    %v135 = vadd.f32 %v88, %v134
    %v136 = vpop.f32.mrf.mxu0
    %v137 = vadd.f32 %v88, %v136
    %138 = vdwg.mxu0
    %139 = vmatpush.bf16.msra.mxu0 0
    %140 = vmatpush.bf16.msra.mxu0 0
    %141 = vmatpush.bf16.msra.mxu0 0
    %142 = vmatpush.bf16.msra.mxu0 0
    %143 = vmatpush.bf16.msra.mxu0 0
    %144 = vmatpush.bf16.msra.mxu0 0
    %145 = vmatpush.bf16.msra.mxu0 0
    %146 = vmatpush.bf16.msra.mxu0 %v114
    %147 = vmatmul.bf16.gmra.mxu0 %v123
    %v148 = vpop.f32.mrf.mxu0
    %v149 = vadd.f32 %v89, %v148
    %v150 = vpop.f32.mrf.mxu0
    %v151 = vadd.f32 %v89, %v150
    %152 = vdwg.mxu0
    %153 = vmatpush.bf16.msra.mxu0 0
    %154 = vmatpush.bf16.msra.mxu0 0
    %155 = vmatpush.bf16.msra.mxu0 0
    %156 = vmatpush.bf16.msra.mxu0 0
    %157 = vmatpush.bf16.msra.mxu0 0
    %158 = vmatpush.bf16.msra.mxu0 0
    %159 = vmatpush.bf16.msra.mxu0 0
    %160 = vmatpush.bf16.msra.mxu0 %v115
    %161 = vmatmul.bf16.gmra.mxu0 %v123
    %v162 = vpop.f32.mrf.mxu0
    %v163 = vadd.f32 %v90, %v162
    %v164 = vpop.f32.mrf.mxu0
    %v165 = vadd.f32 %v90, %v164
    %166 = vdwg.mxu0
    %167 = vmatpush.bf16.msra.mxu0 0
    %168 = vmatpush.bf16.msra.mxu0 0
    %169 = vmatpush.bf16.msra.mxu0 0
    %170 = vmatpush.bf16.msra.mxu0 0
    %171 = vmatpush.bf16.msra.mxu0 0
    %172 = vmatpush.bf16.msra.mxu0 0
    %173 = vmatpush.bf16.msra.mxu0 0
    %174 = vmatpush.bf16.msra.mxu0 %v116
    %175 = vmatmul.bf16.gmra.mxu0 %v123
    %v176 = vpop.f32.mrf.mxu0
    %v177 = vadd.f32 %v91, %v176
    %v178 = vpop.f32.mrf.mxu0
    %v179 = vadd.f32 %v91, %v178
    %180 = vdwg.mxu0
    %v181 = vmax.f32 %v135, 0.0
    %v182 = vmax.f32 %v149, 0.0
    %v183 = vmax.f32 %v163, 0.0
    %v184 = vmax.f32 %v177, 0.0
    %v185 = vmax.f32 %v137, 0.0
    %v186 = vmax.f32 %v151, 0.0
    %v187 = vmax.f32 %v165, 0.0
    %v188 = vmax.f32 %v179, 0.0
    %v189 = vpack.c.bf16 %v185, %v181
    %v190 = vpack.c.bf16 %v186, %v182
    %v191 = vpack.c.bf16 %v187, %v183
    %v192 = vpack.c.bf16 %v188, %v184
    %v193 = vld [vmem:[#allocation4] sm:$0xff]
    %v194 = vld [vmem:[#allocation4 + $0x8] sm:$0xf]
    %v195 = vld [vmem:[#allocation4 + $0xc] sm:$0xff]
    %v196 = vld [vmem:[#allocation4 + $0x14] sm:$0xf]
    %v197 = vld [vmem:[#allocation4 + $0x18] sm:$0xff]
    %v198 = vld [vmem:[#allocation4 + $0x20] sm:$0xf]
    %v199 = vld [vmem:[#allocation4 + $0x24] sm:$0xff]
    %v200 = vld [vmem:[#allocation4 + $0x2c] sm:$0xf]
    %v201 = vld [vmem:[#allocation4 + $0x30] sm:$0xff]
    %v202 = vld [vmem:[#allocation4 + $0x38] sm:$0xf]
    %v203 = vld [vmem:[#allocation4 + $0x3c] sm:$0xff]
    %v204 = vld [vmem:[#allocation4 + $0x44] sm:$0xf]
    %v205 = vld [vmem:[#allocation4 + $0x48] sm:$0xff]
    %v206 = vld [vmem:[#allocation4 + $0x50] sm:$0xf]
    %v207 = vld [vmem:[#allocation4 + $0x54] sm:$0xff]
    %v208 = vld [vmem:[#allocation4 + $0x5c] sm:$0xf]
    %v209 = vld [vmem:[#allocation4 + $0x60] sm:$0xff]
    %v210 = vld [vmem:[#allocation4 + $0x68] sm:$0xf]
    %v211 = vld [vmem:[#allocation4 + $0x6c] sm:$0xff]
    %v212 = vld [vmem:[#allocation4 + $0x74] sm:$0xf]
    %v213 = vld [vmem:[#allocation4 + $0x78] sm:$0xff]
    %v214 = vld [vmem:[#allocation4 + $0x80] sm:$0xf]
    %v215 = vld [vmem:[#allocation4 + $0x84] sm:$0xff]
    %v216 = vld [vmem:[#allocation4 + $0x8c] sm:$0xf]
    %v217 = vld [vmem:[#allocation4 + $0x90] sm:$0xff]
    %v218 = vld [vmem:[#allocation4 + $0x98] sm:$0xf]
    %v219 = vld [vmem:[#allocation4 + $0x9c] sm:$0xff]
    %v220 = vld [vmem:[#allocation4 + $0xa4] sm:$0xf]
    %v221 = vld [vmem:[#allocation4 + $0xa8] sm:$0xff]
    %v222 = vld [vmem:[#allocation4 + $0xb0] sm:$0xf]
    %v223 = vld [vmem:[#allocation4 + $0xb4] sm:$0xff]
    %v224 = vld [vmem:[#allocation4 + $0xbc] sm:$0xf]
    %v225 = vld [vmem:[#allocation4 + $0xc0] sm:$0xff]
    %v226 = vld [vmem:[#allocation4 + $0xc8] sm:$0xf]
    %v227 = vld [vmem:[#allocation4 + $0xcc] sm:$0xff]
    %v228 = vld [vmem:[#allocation4 + $0xd4] sm:$0xf]
    %v229 = vld [vmem:[#allocation4 + $0xd8] sm:$0xff]
    %v230 = vld [vmem:[#allocation4 + $0xe0] sm:$0xf]
    %v231 = vld [vmem:[#allocation4 + $0xe4] sm:$0xff]
    %v232 = vld [vmem:[#allocation4 + $0xec] sm:$0xf]
    %v233 = vld [vmem:[#allocation4 + $0xf0] sm:$0xff]
    %v234 = vld [vmem:[#allocation4 + $0xf8] sm:$0xf]
    %v235 = vld [vmem:[#allocation4 + $0xfc] sm:$0xff]
    %v236 = vld [vmem:[#allocation4 + $0x104] sm:$0xf]
    %v237 = vld [vmem:[#allocation4 + $0x108] sm:$0xff]
    %v238 = vld [vmem:[#allocation4 + $0x110] sm:$0xf]
    %v239 = vld [vmem:[#allocation4 + $0x114] sm:$0xff]
    %v240 = vld [vmem:[#allocation4 + $0x11c] sm:$0xf]
    %v241 = vld [vmem:[#allocation4 + $0x120] sm:$0xff]
    %v242 = vld [vmem:[#allocation4 + $0x128] sm:$0xf]
    %v243 = vld [vmem:[#allocation4 + $0x12c] sm:$0xff]
    %v244 = vld [vmem:[#allocation4 + $0x134] sm:$0xf]
    %v245 = vld [vmem:[#allocation4 + $0x138] sm:$0xff]
    %v246 = vld [vmem:[#allocation4 + $0x140] sm:$0xf]
    %v247 = vld [vmem:[#allocation4 + $0x144] sm:$0xff]
    %v248 = vld [vmem:[#allocation4 + $0x14c] sm:$0xf]
    %v249 = vld [vmem:[#allocation4 + $0x150] sm:$0xff]
    %v250 = vld [vmem:[#allocation4 + $0x158] sm:$0xf]
    %v251 = vld [vmem:[#allocation4 + $0x15c] sm:$0xff]
    %v252 = vld [vmem:[#allocation4 + $0x164] sm:$0xf]
    %v253 = vld [vmem:[#allocation4 + $0x168] sm:$0xff]
    %v254 = vld [vmem:[#allocation4 + $0x170] sm:$0xf]
    %v255 = vld [vmem:[#allocation4 + $0x174] sm:$0xff]
    %v256 = vld [vmem:[#allocation4 + $0x17c] sm:$0xf]
    %v257 = vld [vmem:[#allocation4 + $0x180] sm:$0xff]
    %v258 = vld [vmem:[#allocation4 + $0x188] sm:$0xf]
    %v259 = vld [vmem:[#allocation4 + $0x18c] sm:$0xff]
    %v260 = vld [vmem:[#allocation4 + $0x194] sm:$0xf]
    %v261 = vld [vmem:[#allocation4 + $0x198] sm:$0xff]
    %v262 = vld [vmem:[#allocation4 + $0x1a0] sm:$0xf]
    %v263 = vld [vmem:[#allocation4 + $0x1a4] sm:$0xff]
    %v264 = vld [vmem:[#allocation4 + $0x1ac] sm:$0xf]
    %v265 = vld [vmem:[#allocation4 + $0x1b0] sm:$0xff]
    %v266 = vld [vmem:[#allocation4 + $0x1b8] sm:$0xf]
    %v267 = vld [vmem:[#allocation4 + $0x1bc] sm:$0xff]
    %v268 = vld [vmem:[#allocation4 + $0x1c4] sm:$0xf]
    %v269 = vld [vmem:[#allocation4 + $0x1c8] sm:$0xff]
    %v270 = vld [vmem:[#allocation4 + $0x1d0] sm:$0xf]
    %v271 = vld [vmem:[#allocation4 + $0x1d4] sm:$0xff]
    %v272 = vld [vmem:[#allocation4 + $0x1dc] sm:$0xf]
    %v273 = vld [vmem:[#allocation4 + $0x1e0] sm:$0xff]
    %v274 = vld [vmem:[#allocation4 + $0x1e8] sm:$0xf]
    %v275 = vld [vmem:[#allocation4 + $0x1ec] sm:$0xff]
    %v276 = vld [vmem:[#allocation4 + $0x1f4] sm:$0xf]
    %v277 = vld [vmem:[#allocation4 + $0x1f8] sm:$0xff]
    %v278 = vld [vmem:[#allocation4 + $0x200] sm:$0xf]
    %v279 = vld [vmem:[#allocation4 + $0x204] sm:$0xff]
    %v280 = vld [vmem:[#allocation4 + $0x20c] sm:$0xf]
    %v281 = vld [vmem:[#allocation4 + $0x210] sm:$0xff]
    %v282 = vld [vmem:[#allocation4 + $0x218] sm:$0xf]
    %v283 = vld [vmem:[#allocation4 + $0x21c] sm:$0xff]
    %v284 = vld [vmem:[#allocation4 + $0x224] sm:$0xf]
    %v285 = vld [vmem:[#allocation4 + $0x228] sm:$0xff]
    %v286 = vld [vmem:[#allocation4 + $0x230] sm:$0xf]
    %v287 = vld [vmem:[#allocation4 + $0x234] sm:$0xff]
    %v288 = vld [vmem:[#allocation4 + $0x23c] sm:$0xf]
    %v289 = vld [vmem:[#allocation4 + $0x240] sm:$0xff]
    %v290 = vld [vmem:[#allocation4 + $0x248] sm:$0xf]
    %v291 = vld [vmem:[#allocation4 + $0x24c] sm:$0xff]
    %v292 = vld [vmem:[#allocation4 + $0x254] sm:$0xf]
    %v293 = vld [vmem:[#allocation4 + $0x258] sm:$0xff]
    %v294 = vld [vmem:[#allocation4 + $0x260] sm:$0xf]
    %v295 = vld [vmem:[#allocation4 + $0x264] sm:$0xff]
    %v296 = vld [vmem:[#allocation4 + $0x26c] sm:$0xf]
    %v297 = vld [vmem:[#allocation4 + $0x270] sm:$0xff]
    %v298 = vld [vmem:[#allocation4 + $0x278] sm:$0xf]
    %v299 = vld [vmem:[#allocation4 + $0x27c] sm:$0xff]
    %v300 = vld [vmem:[#allocation4 + $0x284] sm:$0xf]
    %v301 = vld [vmem:[#allocation4 + $0x288] sm:$0xff]
    %v302 = vld [vmem:[#allocation4 + $0x290] sm:$0xf]
    %v303 = vld [vmem:[#allocation4 + $0x294] sm:$0xff]
    %v304 = vld [vmem:[#allocation4 + $0x29c] sm:$0xf]
    %v305 = vld [vmem:[#allocation4 + $0x2a0] sm:$0xff]
    %v306 = vld [vmem:[#allocation4 + $0x2a8] sm:$0xf]
    %v307 = vld [vmem:[#allocation4 + $0x2ac] sm:$0xff]
    %v308 = vld [vmem:[#allocation4 + $0x2b4] sm:$0xf]
    %v309 = vld [vmem:[#allocation4 + $0x2b8] sm:$0xff]
    %v310 = vld [vmem:[#allocation4 + $0x2c0] sm:$0xf]
    %v311 = vld [vmem:[#allocation4 + $0x2c4] sm:$0xff]
    %v312 = vld [vmem:[#allocation4 + $0x2cc] sm:$0xf]
    %v313 = vld [vmem:[#allocation4 + $0x2d0] sm:$0xff]
    %v314 = vld [vmem:[#allocation4 + $0x2d8] sm:$0xf]
    %v315 = vld [vmem:[#allocation4 + $0x2dc] sm:$0xff]
    %v316 = vld [vmem:[#allocation4 + $0x2e4] sm:$0xf]
    %v317 = vld [vmem:[#allocation4 + $0x2e8] sm:$0xff]
    %v318 = vld [vmem:[#allocation4 + $0x2f0] sm:$0xf]
    %v319 = vld [vmem:[#allocation4 + $0x2f4] sm:$0xff]
    %v320 = vld [vmem:[#allocation4 + $0x2fc] sm:$0xf]
    %v321 = vld [vmem:[%s4] sm:$0x7]
    %v323 = vperm.slane %v321, 0
    %v324 = vperm.slane %v321, 1
    %v325 = vperm.slane %v321, 2
    %v457 = vunpack.c.l.b16 %v193
    %v458 = vunpack.c.h.b16 %v193
    %v459 = vunpack.c.l.b16 %v194
    %v460 = vunpack.c.l.b16 %v195
    %v461 = vunpack.c.h.b16 %v195
    %v462 = vunpack.c.l.b16 %v196
    %v463 = vunpack.c.l.b16 %v197
    %v464 = vunpack.c.h.b16 %v197
    %v465 = vunpack.c.l.b16 %v198
    %v466 = vunpack.c.l.b16 %v199
    %v467 = vunpack.c.h.b16 %v199
    %v468 = vunpack.c.l.b16 %v200
    %v469 = vunpack.c.l.b16 %v201
    %v470 = vunpack.c.h.b16 %v201
    %v471 = vunpack.c.l.b16 %v202
    %v472 = vunpack.c.l.b16 %v203
    %v473 = vunpack.c.h.b16 %v203
    %v474 = vunpack.c.l.b16 %v204
    %v475 = vunpack.c.l.b16 %v205
    %v476 = vunpack.c.h.b16 %v205
    %v477 = vunpack.c.l.b16 %v206
    %v478 = vunpack.c.l.b16 %v207
    %v479 = vunpack.c.h.b16 %v207
    %v480 = vunpack.c.l.b16 %v208
    %v481 = vunpack.c.l.b16 %v209
    %v482 = vunpack.c.h.b16 %v209
    %v483 = vunpack.c.l.b16 %v210
    %v484 = vunpack.c.l.b16 %v211
    %v485 = vunpack.c.h.b16 %v211
    %v486 = vunpack.c.l.b16 %v212
    %v487 = vunpack.c.l.b16 %v213
    %v488 = vunpack.c.h.b16 %v213
    %v489 = vunpack.c.l.b16 %v214
    %v490 = vunpack.c.l.b16 %v215
    %v491 = vunpack.c.h.b16 %v215
    %v492 = vunpack.c.l.b16 %v216
    %v493 = vunpack.c.l.b16 %v217
    %v494 = vunpack.c.h.b16 %v217
    %v495 = vunpack.c.l.b16 %v218
    %v496 = vunpack.c.l.b16 %v219
    %v497 = vunpack.c.h.b16 %v219
    %v498 = vunpack.c.l.b16 %v220
    %v499 = vunpack.c.l.b16 %v221
    %v500 = vunpack.c.h.b16 %v221
    %v501 = vunpack.c.l.b16 %v222
    %v502 = vunpack.c.l.b16 %v223
    %v503 = vunpack.c.h.b16 %v223
    %v504 = vunpack.c.l.b16 %v224
    %v505 = vunpack.c.l.b16 %v225
    %v506 = vunpack.c.h.b16 %v225
    %v507 = vunpack.c.l.b16 %v226
    %v508 = vunpack.c.l.b16 %v227
    %v509 = vunpack.c.h.b16 %v227
    %v510 = vunpack.c.l.b16 %v228
    %v511 = vunpack.c.l.b16 %v229
    %v512 = vunpack.c.h.b16 %v229
    %v513 = vunpack.c.l.b16 %v230
    %v514 = vunpack.c.l.b16 %v231
    %v515 = vunpack.c.h.b16 %v231
    %v516 = vunpack.c.l.b16 %v232
    %v517 = vunpack.c.l.b16 %v233
    %v518 = vunpack.c.h.b16 %v233
    %v519 = vunpack.c.l.b16 %v234
    %v520 = vunpack.c.l.b16 %v235
    %v521 = vunpack.c.h.b16 %v235
    %v522 = vunpack.c.l.b16 %v236
    %v523 = vunpack.c.l.b16 %v237
    %v524 = vunpack.c.h.b16 %v237
    %v525 = vunpack.c.l.b16 %v238
    %v526 = vunpack.c.l.b16 %v239
    %v527 = vunpack.c.h.b16 %v239
    %v528 = vunpack.c.l.b16 %v240
    %v529 = vunpack.c.l.b16 %v241
    %v530 = vunpack.c.h.b16 %v241
    %v531 = vunpack.c.l.b16 %v242
    %v532 = vunpack.c.l.b16 %v243
    %v533 = vunpack.c.h.b16 %v243
    %v534 = vunpack.c.l.b16 %v244
    %v535 = vunpack.c.l.b16 %v245
    %v536 = vunpack.c.h.b16 %v245
    %v537 = vunpack.c.l.b16 %v246
    %v538 = vunpack.c.l.b16 %v247
    %v539 = vunpack.c.h.b16 %v247
    %v540 = vunpack.c.l.b16 %v248
    %v541 = vunpack.c.l.b16 %v249
    %v542 = vunpack.c.h.b16 %v249
    %v543 = vunpack.c.l.b16 %v250
    %v544 = vunpack.c.l.b16 %v251
    %v545 = vunpack.c.h.b16 %v251
    %v546 = vunpack.c.l.b16 %v252
    %v547 = vunpack.c.l.b16 %v253
    %v548 = vunpack.c.h.b16 %v253
    %v549 = vunpack.c.l.b16 %v254
    %v550 = vunpack.c.l.b16 %v255
    %v551 = vunpack.c.h.b16 %v255
    %v552 = vunpack.c.l.b16 %v256
    %v553 = vunpack.c.l.b16 %v257
    %v554 = vunpack.c.h.b16 %v257
    %v555 = vunpack.c.l.b16 %v258
    %v556 = vunpack.c.l.b16 %v259
    %v557 = vunpack.c.h.b16 %v259
    %v558 = vunpack.c.l.b16 %v260
    %v559 = vunpack.c.l.b16 %v261
    %v560 = vunpack.c.h.b16 %v261
    %v561 = vunpack.c.l.b16 %v262
    %v562 = vunpack.c.l.b16 %v263
    %v563 = vunpack.c.h.b16 %v263
    %v564 = vunpack.c.l.b16 %v264
    %v565 = vunpack.c.l.b16 %v265
    %v566 = vunpack.c.h.b16 %v265
    %v567 = vunpack.c.l.b16 %v266
    %v568 = vunpack.c.l.b16 %v267
    %v569 = vunpack.c.h.b16 %v267
    %v570 = vunpack.c.l.b16 %v268
    %v571 = vunpack.c.l.b16 %v269
    %v572 = vunpack.c.h.b16 %v269
    %v573 = vunpack.c.l.b16 %v270
    %v574 = vunpack.c.l.b16 %v271
    %v575 = vunpack.c.h.b16 %v271
    %v576 = vunpack.c.l.b16 %v272
    %v577 = vunpack.c.l.b16 %v273
    %v578 = vunpack.c.h.b16 %v273
    %v579 = vunpack.c.l.b16 %v274
    %v580 = vunpack.c.l.b16 %v275
    %v581 = vunpack.c.h.b16 %v275
    %v582 = vunpack.c.l.b16 %v276
    %v583 = vunpack.c.l.b16 %v277
    %v584 = vunpack.c.h.b16 %v277
    %v585 = vunpack.c.l.b16 %v278
    %v586 = vunpack.c.l.b16 %v279
    %v587 = vunpack.c.h.b16 %v279
    %v588 = vunpack.c.l.b16 %v280
    %v589 = vunpack.c.l.b16 %v281
    %v590 = vunpack.c.h.b16 %v281
    %v591 = vunpack.c.l.b16 %v282
    %v592 = vunpack.c.l.b16 %v283
    %v593 = vunpack.c.h.b16 %v283
    %v594 = vunpack.c.l.b16 %v284
    %v595 = vunpack.c.l.b16 %v285
    %v596 = vunpack.c.h.b16 %v285
    %v597 = vunpack.c.l.b16 %v286
    %v598 = vunpack.c.l.b16 %v287
    %v599 = vunpack.c.h.b16 %v287
    %v600 = vunpack.c.l.b16 %v288
    %v601 = vunpack.c.l.b16 %v289
    %v602 = vunpack.c.h.b16 %v289
    %v603 = vunpack.c.l.b16 %v290
    %v604 = vunpack.c.l.b16 %v291
    %v605 = vunpack.c.h.b16 %v291
    %v606 = vunpack.c.l.b16 %v292
    %v607 = vunpack.c.l.b16 %v293
    %v608 = vunpack.c.h.b16 %v293
    %v609 = vunpack.c.l.b16 %v294
    %v610 = vunpack.c.l.b16 %v295
    %v611 = vunpack.c.h.b16 %v295
    %v612 = vunpack.c.l.b16 %v296
    %v613 = vunpack.c.l.b16 %v297
    %v614 = vunpack.c.h.b16 %v297
    %v615 = vunpack.c.l.b16 %v298
    %v616 = vunpack.c.l.b16 %v299
    %v617 = vunpack.c.h.b16 %v299
    %v618 = vunpack.c.l.b16 %v300
    %v619 = vunpack.c.l.b16 %v301
    %v620 = vunpack.c.h.b16 %v301
    %v621 = vunpack.c.l.b16 %v302
    %v622 = vunpack.c.l.b16 %v303
    %v623 = vunpack.c.h.b16 %v303
    %v624 = vunpack.c.l.b16 %v304
    %v625 = vunpack.c.l.b16 %v305
    %v626 = vunpack.c.h.b16 %v305
    %v627 = vunpack.c.l.b16 %v306
    %v628 = vunpack.c.l.b16 %v307
    %v629 = vunpack.c.h.b16 %v307
    %v630 = vunpack.c.l.b16 %v308
    %v631 = vunpack.c.l.b16 %v309
    %v632 = vunpack.c.h.b16 %v309
    %v633 = vunpack.c.l.b16 %v310
    %v634 = vunpack.c.l.b16 %v311
    %v635 = vunpack.c.h.b16 %v311
    %v636 = vunpack.c.l.b16 %v312
    %v637 = vunpack.c.l.b16 %v313
    %v638 = vunpack.c.h.b16 %v313
    %v639 = vunpack.c.l.b16 %v314
    %v640 = vunpack.c.l.b16 %v315
    %v641 = vunpack.c.h.b16 %v315
    %v642 = vunpack.c.l.b16 %v316
    %v643 = vunpack.c.l.b16 %v317
    %v644 = vunpack.c.h.b16 %v317
    %v645 = vunpack.c.l.b16 %v318
    %v646 = vunpack.c.l.b16 %v319
    %v647 = vunpack.c.h.b16 %v319
    %v648 = vunpack.c.l.b16 %v320
    %v649 = vpack.c.b16 %v460, %v457
    %v650 = vpack.c.b16 %v461, %v458
    %v651 = vpack.c.b16 %v462, %v459
    %v652 = vpack.c.b16 %v466, %v463
    %v653 = vpack.c.b16 %v467, %v464
    %v654 = vpack.c.b16 %v468, %v465
    %v655 = vpack.c.b16 %v472, %v469
    %v656 = vpack.c.b16 %v473, %v470
    %v657 = vpack.c.b16 %v474, %v471
    %v658 = vpack.c.b16 %v478, %v475
    %v659 = vpack.c.b16 %v479, %v476
    %v660 = vpack.c.b16 %v480, %v477
    %v661 = vpack.c.b16 %v484, %v481
    %v662 = vpack.c.b16 %v485, %v482
    %v663 = vpack.c.b16 %v486, %v483
    %v664 = vpack.c.b16 %v490, %v487
    %v665 = vpack.c.b16 %v491, %v488
    %v666 = vpack.c.b16 %v492, %v489
    %v667 = vpack.c.b16 %v496, %v493
    %v668 = vpack.c.b16 %v497, %v494
    %v669 = vpack.c.b16 %v498, %v495
    %v670 = vpack.c.b16 %v502, %v499
    %v671 = vpack.c.b16 %v503, %v500
    %v672 = vpack.c.b16 %v504, %v501
    %v673 = vpack.c.b16 %v508, %v505
    %v674 = vpack.c.b16 %v509, %v506
    %v675 = vpack.c.b16 %v510, %v507
    %v676 = vpack.c.b16 %v514, %v511
    %v677 = vpack.c.b16 %v515, %v512
    %v678 = vpack.c.b16 %v516, %v513
    %v679 = vpack.c.b16 %v520, %v517
    %v680 = vpack.c.b16 %v521, %v518
    %v681 = vpack.c.b16 %v522, %v519
    %v682 = vpack.c.b16 %v526, %v523
    %v683 = vpack.c.b16 %v527, %v524
    %v684 = vpack.c.b16 %v528, %v525
    %v685 = vpack.c.b16 %v532, %v529
    %v686 = vpack.c.b16 %v533, %v530
    %v687 = vpack.c.b16 %v534, %v531
    %v688 = vpack.c.b16 %v538, %v535
    %v689 = vpack.c.b16 %v539, %v536
    %v690 = vpack.c.b16 %v540, %v537
    %v691 = vpack.c.b16 %v544, %v541
    %v692 = vpack.c.b16 %v545, %v542
    %v693 = vpack.c.b16 %v546, %v543
    %v694 = vpack.c.b16 %v550, %v547
    %v695 = vpack.c.b16 %v551, %v548
    %v696 = vpack.c.b16 %v552, %v549
    %v697 = vpack.c.b16 %v556, %v553
    %v698 = vpack.c.b16 %v557, %v554
    %v699 = vpack.c.b16 %v558, %v555
    %v700 = vpack.c.b16 %v562, %v559
    %v701 = vpack.c.b16 %v563, %v560
    %v702 = vpack.c.b16 %v564, %v561
    %v703 = vpack.c.b16 %v568, %v565
    %v704 = vpack.c.b16 %v569, %v566
    %v705 = vpack.c.b16 %v570, %v567
    %v706 = vpack.c.b16 %v574, %v571
    %v707 = vpack.c.b16 %v575, %v572
    %v708 = vpack.c.b16 %v576, %v573
    %v709 = vpack.c.b16 %v580, %v577
    %v710 = vpack.c.b16 %v581, %v578
    %v711 = vpack.c.b16 %v582, %v579
    %v712 = vpack.c.b16 %v586, %v583
    %v713 = vpack.c.b16 %v587, %v584
    %v714 = vpack.c.b16 %v588, %v585
    %v715 = vpack.c.b16 %v592, %v589
    %v716 = vpack.c.b16 %v593, %v590
    %v717 = vpack.c.b16 %v594, %v591
    %v718 = vpack.c.b16 %v598, %v595
    %v719 = vpack.c.b16 %v599, %v596
    %v720 = vpack.c.b16 %v600, %v597
    %v721 = vpack.c.b16 %v604, %v601
    %v722 = vpack.c.b16 %v605, %v602
    %v723 = vpack.c.b16 %v606, %v603
    %v724 = vpack.c.b16 %v610, %v607
    %v725 = vpack.c.b16 %v611, %v608
    %v726 = vpack.c.b16 %v612, %v609
    %v727 = vpack.c.b16 %v616, %v613
    %v728 = vpack.c.b16 %v617, %v614
    %v729 = vpack.c.b16 %v618, %v615
    %v730 = vpack.c.b16 %v622, %v619
    %v731 = vpack.c.b16 %v623, %v620
    %v732 = vpack.c.b16 %v624, %v621
    %v733 = vpack.c.b16 %v628, %v625
    %v734 = vpack.c.b16 %v629, %v626
    %v735 = vpack.c.b16 %v630, %v627
    %v736 = vpack.c.b16 %v634, %v631
    %v737 = vpack.c.b16 %v635, %v632
    %v738 = vpack.c.b16 %v636, %v633
    %v739 = vpack.c.b16 %v640, %v637
    %v740 = vpack.c.b16 %v641, %v638
    %v741 = vpack.c.b16 %v642, %v639
    %v742 = vpack.c.b16 %v646, %v643
    %v743 = vpack.c.b16 %v647, %v644
    %v744 = vpack.c.b16 %v648, %v645
    %841 = vmatpush.bf16.msra.mxu0 %v670
    %842 = vmatpush.bf16.msra.mxu0 %v667
    %843 = vmatpush.bf16.msra.mxu0 %v664
    %844 = vmatpush.bf16.msra.mxu0 %v661
    %845 = vmatpush.bf16.msra.mxu0 %v658
    %846 = vmatpush.bf16.msra.mxu0 %v655
    %847 = vmatpush.bf16.msra.mxu0 %v652
    %848 = vmatpush.bf16.msra.mxu0 %v649
    %849 = vmatmul.bf16.gmra.mxu0 %v189
    %v850 = vpop.f32.mrf.mxu0
    %v851 = vadd.f32 %v323, %v850
    %v852 = vpop.f32.mrf.mxu0
    %v853 = vadd.f32 %v323, %v852
    %854 = vdwg.mxu0
    %855 = vmatpush.bf16.msra.mxu0 %v694
    %856 = vmatpush.bf16.msra.mxu0 %v691
    %857 = vmatpush.bf16.msra.mxu0 %v688
    %858 = vmatpush.bf16.msra.mxu0 %v685
    %859 = vmatpush.bf16.msra.mxu0 %v682
    %860 = vmatpush.bf16.msra.mxu0 %v679
    %861 = vmatpush.bf16.msra.mxu0 %v676
    %862 = vmatpush.bf16.msra.mxu0 %v673
    %863 = vmatmul.bf16.gmra.mxu0 %v190
    %v864 = vpop.f32.mrf.mxu0
    %v865 = vadd.f32 %v851, %v864
    %v866 = vpop.f32.mrf.mxu0
    %v867 = vadd.f32 %v853, %v866
    %868 = vdwg.mxu0
    %869 = vmatpush.bf16.msra.mxu0 %v718
    %870 = vmatpush.bf16.msra.mxu0 %v715
    %871 = vmatpush.bf16.msra.mxu0 %v712
    %872 = vmatpush.bf16.msra.mxu0 %v709
    %873 = vmatpush.bf16.msra.mxu0 %v706
    %874 = vmatpush.bf16.msra.mxu0 %v703
    %875 = vmatpush.bf16.msra.mxu0 %v700
    %876 = vmatpush.bf16.msra.mxu0 %v697
    %877 = vmatmul.bf16.gmra.mxu0 %v191
    %v878 = vpop.f32.mrf.mxu0
    %v879 = vadd.f32 %v865, %v878
    %v880 = vpop.f32.mrf.mxu0
    %v881 = vadd.f32 %v867, %v880
    %882 = vdwg.mxu0
    %883 = vmatpush.bf16.msra.mxu0 %v742
    %884 = vmatpush.bf16.msra.mxu0 %v739
    %885 = vmatpush.bf16.msra.mxu0 %v736
    %886 = vmatpush.bf16.msra.mxu0 %v733
    %887 = vmatpush.bf16.msra.mxu0 %v730
    %888 = vmatpush.bf16.msra.mxu0 %v727
    %889 = vmatpush.bf16.msra.mxu0 %v724
    %890 = vmatpush.bf16.msra.mxu0 %v721
    %891 = vmatmul.bf16.gmra.mxu0 %v192
    %v892 = vpop.f32.mrf.mxu0
    %v893 = vadd.f32 %v879, %v892
    %v894 = vpop.f32.mrf.mxu0
    %v895 = vadd.f32 %v881, %v894
    %896 = vdwg.mxu0
    %897 = vmatpush.bf16.msra.mxu0 %v671
    %898 = vmatpush.bf16.msra.mxu0 %v668
    %899 = vmatpush.bf16.msra.mxu0 %v665
    %900 = vmatpush.bf16.msra.mxu0 %v662
    %901 = vmatpush.bf16.msra.mxu0 %v659
    %902 = vmatpush.bf16.msra.mxu0 %v656
    %903 = vmatpush.bf16.msra.mxu0 %v653
    %904 = vmatpush.bf16.msra.mxu0 %v650
    %905 = vmatmul.bf16.gmra.mxu0 %v189
    %v906 = vpop.f32.mrf.mxu0
    %v907 = vadd.f32 %v324, %v906
    %v908 = vpop.f32.mrf.mxu0
    %v909 = vadd.f32 %v324, %v908
    %910 = vdwg.mxu0
    %911 = vmatpush.bf16.msra.mxu0 %v695
    %912 = vmatpush.bf16.msra.mxu0 %v692
    %913 = vmatpush.bf16.msra.mxu0 %v689
    %914 = vmatpush.bf16.msra.mxu0 %v686
    %915 = vmatpush.bf16.msra.mxu0 %v683
    %916 = vmatpush.bf16.msra.mxu0 %v680
    %917 = vmatpush.bf16.msra.mxu0 %v677
    %918 = vmatpush.bf16.msra.mxu0 %v674
    %919 = vmatmul.bf16.gmra.mxu0 %v190
    %v920 = vpop.f32.mrf.mxu0
    %v921 = vadd.f32 %v907, %v920
    %v922 = vpop.f32.mrf.mxu0
    %v923 = vadd.f32 %v909, %v922
    %924 = vdwg.mxu0
    %925 = vmatpush.bf16.msra.mxu0 %v719
    %926 = vmatpush.bf16.msra.mxu0 %v716
    %927 = vmatpush.bf16.msra.mxu0 %v713
    %928 = vmatpush.bf16.msra.mxu0 %v710
    %929 = vmatpush.bf16.msra.mxu0 %v707
    %930 = vmatpush.bf16.msra.mxu0 %v704
    %931 = vmatpush.bf16.msra.mxu0 %v701
    %932 = vmatpush.bf16.msra.mxu0 %v698
    %933 = vmatmul.bf16.gmra.mxu0 %v191
    %v934 = vpop.f32.mrf.mxu0
    %v935 = vadd.f32 %v921, %v934
    %v936 = vpop.f32.mrf.mxu0
    %v937 = vadd.f32 %v923, %v936
    %938 = vdwg.mxu0
    %939 = vmatpush.bf16.msra.mxu0 %v743
    %940 = vmatpush.bf16.msra.mxu0 %v740
    %941 = vmatpush.bf16.msra.mxu0 %v737
    %942 = vmatpush.bf16.msra.mxu0 %v734
    %943 = vmatpush.bf16.msra.mxu0 %v731
    %944 = vmatpush.bf16.msra.mxu0 %v728
    %945 = vmatpush.bf16.msra.mxu0 %v725
    %946 = vmatpush.bf16.msra.mxu0 %v722
    %947 = vmatmul.bf16.gmra.mxu0 %v192
    %v948 = vpop.f32.mrf.mxu0
    %v949 = vadd.f32 %v935, %v948
    %v950 = vpop.f32.mrf.mxu0
    %v951 = vadd.f32 %v937, %v950
    %952 = vdwg.mxu0
    %953 = vmatpush.bf16.msra.mxu0 %v672
    %954 = vmatpush.bf16.msra.mxu0 %v669
    %955 = vmatpush.bf16.msra.mxu0 %v666
    %956 = vmatpush.bf16.msra.mxu0 %v663
    %957 = vmatpush.bf16.msra.mxu0 %v660
    %958 = vmatpush.bf16.msra.mxu0 %v657
    %959 = vmatpush.bf16.msra.mxu0 %v654
    %960 = vmatpush.bf16.msra.mxu0 %v651
    %961 = vmatmul.bf16.gmra.mxu0 %v189
    %v962 = vpop.f32.mrf.mxu0
    %v963 = vadd.f32 %v325, %v962
    %v964 = vpop.f32.mrf.mxu0
    %v965 = vadd.f32 %v325, %v964
    %966 = vdwg.mxu0
    %967 = vmatpush.bf16.msra.mxu0 %v696
    %968 = vmatpush.bf16.msra.mxu0 %v693
    %969 = vmatpush.bf16.msra.mxu0 %v690
    %970 = vmatpush.bf16.msra.mxu0 %v687
    %971 = vmatpush.bf16.msra.mxu0 %v684
    %972 = vmatpush.bf16.msra.mxu0 %v681
    %973 = vmatpush.bf16.msra.mxu0 %v678
    %974 = vmatpush.bf16.msra.mxu0 %v675
    %975 = vmatmul.bf16.gmra.mxu0 %v190
    %v976 = vpop.f32.mrf.mxu0
    %v977 = vadd.f32 %v963, %v976
    %v978 = vpop.f32.mrf.mxu0
    %v979 = vadd.f32 %v965, %v978
    %980 = vdwg.mxu0
    %981 = vmatpush.bf16.msra.mxu0 %v720
    %982 = vmatpush.bf16.msra.mxu0 %v717
    %983 = vmatpush.bf16.msra.mxu0 %v714
    %984 = vmatpush.bf16.msra.mxu0 %v711
    %985 = vmatpush.bf16.msra.mxu0 %v708
    %986 = vmatpush.bf16.msra.mxu0 %v705
    %987 = vmatpush.bf16.msra.mxu0 %v702
    %988 = vmatpush.bf16.msra.mxu0 %v699
    %989 = vmatmul.bf16.gmra.mxu0 %v191
    %v990 = vpop.f32.mrf.mxu0
    %v991 = vadd.f32 %v977, %v990
    %v992 = vpop.f32.mrf.mxu0
    %v993 = vadd.f32 %v979, %v992
    %994 = vdwg.mxu0
    %995 = vmatpush.bf16.msra.mxu0 %v744
    %996 = vmatpush.bf16.msra.mxu0 %v741
    %997 = vmatpush.bf16.msra.mxu0 %v738
    %998 = vmatpush.bf16.msra.mxu0 %v735
    %999 = vmatpush.bf16.msra.mxu0 %v732
    %1000 = vmatpush.bf16.msra.mxu0 %v729
    %1001 = vmatpush.bf16.msra.mxu0 %v726
    %1002 = vmatpush.bf16.msra.mxu0 %v723
    %1003 = vmatmul.bf16.gmra.mxu0 %v192
    %v1004 = vpop.f32.mrf.mxu0
    %v1005 = vadd.f32 %v991, %v1004
    %v1006 = vpop.f32.mrf.mxu0
    %v1007 = vadd.f32 %v993, %v1006
    %1008 = vdwg.mxu0
    %v1009 = vmax.f32 %v893, 0.0
    %v1010 = vmax.f32 %v949, 0.0
    %v1011 = vmax.f32 %v1005, 0.0
    %v1012 = vmax.f32 %v895, 0.0
    %v1013 = vmax.f32 %v951, 0.0
    %v1014 = vmax.f32 %v1007, 0.0
    %v1015 = vpack.c.bf16 %v1012, %v1009
    %v1016 = vpack.c.bf16 %v1013, %v1010
    %v1017 = vpack.c.bf16 %v1014, %v1011
    %v1018 = vld [vmem:[#allocation6] sm:$0xf]
    %v1019 = vld [vmem:[#allocation6 + $0x4] sm:$0xf]
    %v1020 = vld [vmem:[#allocation6 + $0x8] sm:$0xf]
    %v1021 = vld [vmem:[#allocation6 + $0xc] sm:$0xf]
    %v1022 = vld [vmem:[#allocation6 + $0x10] sm:$0xf]
    %v1023 = vld [vmem:[#allocation6 + $0x14] sm:$0xf]
    %v1024 = vld [vmem:[#allocation6 + $0x18] sm:$0xf]
    %v1025 = vld [vmem:[#allocation6 + $0x1c] sm:$0xf]
    %v1026 = vld [vmem:[#allocation6 + $0x20] sm:$0xf]
    %v1027 = vld [vmem:[#allocation6 + $0x24] sm:$0xf]
    %v1028 = vld [vmem:[#allocation6 + $0x28] sm:$0xf]
    %v1029 = vld [vmem:[#allocation6 + $0x2c] sm:$0xf]
    %v1030 = vld [vmem:[#allocation6 + $0x30] sm:$0xf]
    %v1031 = vld [vmem:[#allocation6 + $0x34] sm:$0xf]
    %v1032 = vld [vmem:[#allocation6 + $0x38] sm:$0xf]
    %v1033 = vld [vmem:[#allocation6 + $0x3c] sm:$0xf]
    %v1034 = vld [vmem:[#allocation6 + $0x40] sm:$0xf]
    %v1035 = vld [vmem:[#allocation6 + $0x44] sm:$0xf]
    %v1036 = vld [vmem:[#allocation6 + $0x48] sm:$0xf]
    %v1037 = vld [vmem:[#allocation6 + $0x4c] sm:$0xf]
    %v1038 = vld [vmem:[#allocation6 + $0x50] sm:$0xf]
    %v1039 = vld [vmem:[#allocation6 + $0x54] sm:$0xf]
    %v1040 = vld [vmem:[#allocation6 + $0x58] sm:$0xf]
    %v1041 = vld [vmem:[#allocation6 + $0x5c] sm:$0xf]
    %v1042 = vld [vmem:[#allocation6 + $0x60] sm:$0xf]
    %v1043 = vld [vmem:[#allocation6 + $0x64] sm:$0xf]
    %v1044 = vld [vmem:[#allocation6 + $0x68] sm:$0xf]
    %v1045 = vld [vmem:[#allocation6 + $0x6c] sm:$0xf]
    %v1046 = vld [vmem:[#allocation6 + $0x70] sm:$0xf]
    %v1047 = vld [vmem:[#allocation6 + $0x74] sm:$0xf]
    %v1048 = vld [vmem:[#allocation6 + $0x78] sm:$0xf]
    %v1049 = vld [vmem:[#allocation6 + $0x7c] sm:$0xf]
    %v1050 = vld [vmem:[#allocation6 + $0x80] sm:$0xf]
    %v1051 = vld [vmem:[#allocation6 + $0x84] sm:$0xf]
    %v1052 = vld [vmem:[#allocation6 + $0x88] sm:$0xf]
    %v1053 = vld [vmem:[#allocation6 + $0x8c] sm:$0xf]
    %v1054 = vld [vmem:[#allocation6 + $0x90] sm:$0xf]
    %v1055 = vld [vmem:[#allocation6 + $0x94] sm:$0xf]
    %v1056 = vld [vmem:[#allocation6 + $0x98] sm:$0xf]
    %v1057 = vld [vmem:[#allocation6 + $0x9c] sm:$0xf]
    %v1058 = vld [vmem:[#allocation6 + $0xa0] sm:$0xf]
    %v1059 = vld [vmem:[#allocation6 + $0xa4] sm:$0xf]
    %v1060 = vld [vmem:[#allocation6 + $0xa8] sm:$0xf]
    %v1061 = vld [vmem:[#allocation6 + $0xac] sm:$0xf]
    %v1062 = vld [vmem:[#allocation6 + $0xb0] sm:$0xf]
    %v1063 = vld [vmem:[#allocation6 + $0xb4] sm:$0xf]
    %v1064 = vld [vmem:[#allocation6 + $0xb8] sm:$0xf]
    %v1065 = vld [vmem:[#allocation6 + $0xbc] sm:$0xf]
    %v1066 = vld [vmem:[%s6] sm:$0x1]
    %v1068 = vperm.slane %v1066, 0
    %v1118 = vunpack.c.l.b16 %v1018
    %v1119 = vunpack.c.l.b16 %v1019
    %v1120 = vunpack.c.l.b16 %v1020
    %v1121 = vunpack.c.l.b16 %v1021
    %v1122 = vunpack.c.l.b16 %v1022
    %v1123 = vunpack.c.l.b16 %v1023
    %v1124 = vunpack.c.l.b16 %v1024
    %v1125 = vunpack.c.l.b16 %v1025
    %v1126 = vunpack.c.l.b16 %v1026
    %v1127 = vunpack.c.l.b16 %v1027
    %v1128 = vunpack.c.l.b16 %v1028
    %v1129 = vunpack.c.l.b16 %v1029
    %v1130 = vunpack.c.l.b16 %v1030
    %v1131 = vunpack.c.l.b16 %v1031
    %v1132 = vunpack.c.l.b16 %v1032
    %v1133 = vunpack.c.l.b16 %v1033
    %v1134 = vunpack.c.l.b16 %v1034
    %v1135 = vunpack.c.l.b16 %v1035
    %v1136 = vunpack.c.l.b16 %v1036
    %v1137 = vunpack.c.l.b16 %v1037
    %v1138 = vunpack.c.l.b16 %v1038
    %v1139 = vunpack.c.l.b16 %v1039
    %v1140 = vunpack.c.l.b16 %v1040
    %v1141 = vunpack.c.l.b16 %v1041
    %v1142 = vunpack.c.l.b16 %v1042
    %v1143 = vunpack.c.l.b16 %v1043
    %v1144 = vunpack.c.l.b16 %v1044
    %v1145 = vunpack.c.l.b16 %v1045
    %v1146 = vunpack.c.l.b16 %v1046
    %v1147 = vunpack.c.l.b16 %v1047
    %v1148 = vunpack.c.l.b16 %v1048
    %v1149 = vunpack.c.l.b16 %v1049
    %v1150 = vunpack.c.l.b16 %v1050
    %v1151 = vunpack.c.l.b16 %v1051
    %v1152 = vunpack.c.l.b16 %v1052
    %v1153 = vunpack.c.l.b16 %v1053
    %v1154 = vunpack.c.l.b16 %v1054
    %v1155 = vunpack.c.l.b16 %v1055
    %v1156 = vunpack.c.l.b16 %v1056
    %v1157 = vunpack.c.l.b16 %v1057
    %v1158 = vunpack.c.l.b16 %v1058
    %v1159 = vunpack.c.l.b16 %v1059
    %v1160 = vunpack.c.l.b16 %v1060
    %v1161 = vunpack.c.l.b16 %v1061
    %v1162 = vunpack.c.l.b16 %v1062
    %v1163 = vunpack.c.l.b16 %v1063
    %v1164 = vunpack.c.l.b16 %v1064
    %v1165 = vunpack.c.l.b16 %v1065
    %v1166 = vpack.c.b16 %v1119, %v1118
    %v1167 = vpack.c.b16 %v1121, %v1120
    %v1168 = vpack.c.b16 %v1123, %v1122
    %v1169 = vpack.c.b16 %v1125, %v1124
    %v1170 = vpack.c.b16 %v1127, %v1126
    %v1171 = vpack.c.b16 %v1129, %v1128
    %v1172 = vpack.c.b16 %v1131, %v1130
    %v1173 = vpack.c.b16 %v1133, %v1132
    %v1174 = vpack.c.b16 %v1135, %v1134
    %v1175 = vpack.c.b16 %v1137, %v1136
    %v1176 = vpack.c.b16 %v1139, %v1138
    %v1177 = vpack.c.b16 %v1141, %v1140
    %v1178 = vpack.c.b16 %v1143, %v1142
    %v1179 = vpack.c.b16 %v1145, %v1144
    %v1180 = vpack.c.b16 %v1147, %v1146
    %v1181 = vpack.c.b16 %v1149, %v1148
    %v1182 = vpack.c.b16 %v1151, %v1150
    %v1183 = vpack.c.b16 %v1153, %v1152
    %v1184 = vpack.c.b16 %v1155, %v1154
    %v1185 = vpack.c.b16 %v1157, %v1156
    %v1186 = vpack.c.b16 %v1159, %v1158
    %v1187 = vpack.c.b16 %v1161, %v1160
    %v1188 = vpack.c.b16 %v1163, %v1162
    %v1189 = vpack.c.b16 %v1165, %v1164
    %1214 = vmatpush.bf16.msra.mxu0 %v1173
    %1215 = vmatpush.bf16.msra.mxu0 %v1172
    %1216 = vmatpush.bf16.msra.mxu0 %v1171
    %1217 = vmatpush.bf16.msra.mxu0 %v1170
    %1218 = vmatpush.bf16.msra.mxu0 %v1169
    %1219 = vmatpush.bf16.msra.mxu0 %v1168
    %1220 = vmatpush.bf16.msra.mxu0 %v1167
    %1221 = vmatpush.bf16.msra.mxu0 %v1166
    %1222 = vmatmul.bf16.gmra.mxu0 %v1015
    %v1223 = vpop.f32.mrf.mxu0
    %v1224 = vadd.f32 %v1068, %v1223
    %v1225 = vpop.f32.mrf.mxu0
    %v1226 = vadd.f32 %v1068, %v1225
    %1227 = vdwg.mxu0
    %1228 = vmatpush.bf16.msra.mxu0 %v1181
    %1229 = vmatpush.bf16.msra.mxu0 %v1180
    %1230 = vmatpush.bf16.msra.mxu0 %v1179
    %1231 = vmatpush.bf16.msra.mxu0 %v1178
    %1232 = vmatpush.bf16.msra.mxu0 %v1177
    %1233 = vmatpush.bf16.msra.mxu0 %v1176
    %1234 = vmatpush.bf16.msra.mxu0 %v1175
    %1235 = vmatpush.bf16.msra.mxu0 %v1174
    %1236 = vmatmul.bf16.gmra.mxu0 %v1016
    %v1237 = vpop.f32.mrf.mxu0
    %v1238 = vadd.f32 %v1224, %v1237
    %v1239 = vpop.f32.mrf.mxu0
    %v1240 = vadd.f32 %v1226, %v1239
    %1241 = vdwg.mxu0
    %1242 = vmatpush.bf16.msra.mxu0 %v1189
    %1243 = vmatpush.bf16.msra.mxu0 %v1188
    %1244 = vmatpush.bf16.msra.mxu0 %v1187
    %1245 = vmatpush.bf16.msra.mxu0 %v1186
    %1246 = vmatpush.bf16.msra.mxu0 %v1185
    %1247 = vmatpush.bf16.msra.mxu0 %v1184
    %1248 = vmatpush.bf16.msra.mxu0 %v1183
    %1249 = vmatpush.bf16.msra.mxu0 %v1182
    %1250 = vmatmul.bf16.gmra.mxu0 %v1017
    %v1251 = vpop.f32.mrf.mxu0
    %v1252 = vadd.f32 %v1238, %v1251
    %v1253 = vpop.f32.mrf.mxu0
    %v1254 = vadd.f32 %v1240, %v1253
    %1255 = vdwg.mxu0
    %v1256 = vmul.f32 %v1252, 1.442695
    %v1257 = vpow.pop %v1256
    %v1258 = vmul.f32 %v1254, 1.442695
    %v1259 = vpow.pop %v1258
    %v1260 = vld [vmem:[%s7] sm:$0xff]
    %v1261 = vld [vmem:[%s7 + $0x8] sm:$0xff]
    %1264 = vrot.lane.b32.xlu0 %v1260, 8
    %v1265 = vpop.permute.xlu0 %1264
    %1266 = vrot.lane.b32.xlu0 %v1261, 8
    %v1267 = vpop.permute.xlu0 %1266
    %v1270 = vmul.f32 %v1257, %v1265
    %v1271 = vmul.f32 %v1259, %v1267
    %1274 = vrot.lane.b32.xlu0 %v1270, 120
    %v1275 = vpop.permute.xlu0 %1274
    %1276 = vrot.lane.b32.xlu0 %v1271, 120
    %v1277 = vpop.permute.xlu0 %1276
    %v1280 = vadd.f32 %v1252, %v1275
    %v1281 = vadd.f32 %v1254, %v1277
    %v1282 = vld [vmem:[%s8] sm:$0x1]
    %v1283 = vtanh.pop %v1280
    %v1284 = vtanh.pop %v1281
    %v1286 = vperm.slane %v1282, 0
    %v1288 = vmul.f32 %v1286, %v1283
    %v1289 = vmul.f32 %v1286, %v1284
    %vm1290 = vcmask 64512
    %1291 = vst.msk [vmem:[%s9] sm:$0xff] %vm1290, %v1288
    %1292 = vst.msk [vmem:[%s9 + $0x8] sm:$0xff] %vm1290, %v1289
    // Predicated region
    $region50: #{tpu_custom_call.1} parent=1 // pred_check
      _
    $region51: #{tpu_custom_call.1} parent=1 // pred_check_branch
      %1294 = sbr.rel (0) target = $region53
    $region52: #{tpu_custom_call.1} parent=1 // pred_region
      _
    $region53: #{tpu_custom_call.1} parent=1 // pred_fallthru
      _
    // Predicated region
    $region54: #{tpu_custom_call.1} parent=1 // pred_check
      _
    $region55: #{tpu_custom_call.1} parent=1 // pred_check_branch
      %1296 = sbr.rel (0) target = $region57
    $region56: #{tpu_custom_call.1} parent=1 // pred_region
      _
    $region57: #{tpu_custom_call.1} parent=1 // pred_fallthru
      _
    %1297 = vsyncpa [#allocation3], 1
    %1298 = vsyncpa [#allocation5], 1

</llo_original>
